<compile_context>
chip_gen: v6e
topology: v6e:2x2x1
jax: 0.10.0
libtpu: 0.0.40
codegen_flags: <defaults>
</compile_context>

<pallas_src>
import functools

import jax
import jax.numpy as jnp
from jax import lax
from jax.experimental import pallas as pl
from jax.experimental.pallas import tpu as pltpu


# ----------------------------- Pallas kernel ---------------------------------
def _mlp_block_kernel(dc, W, x_ref, mask_ref, w1c_ref, w1b_ref, shift_ref, w2_ref,
                      out_ref):
    # x_ref:     (1, C,  HW)   input image (also the residual shortcut), lanes = spatial
    # mask_ref:  (9, HW)       validity masks for the 9 conv taps (zero padding at borders)
    # w1c_ref:   (Hd, 9*dc)    BN-scale-folded w1[:, :dc] with the 3x3 conv weights folded in
    # w1b_ref:   (Hd, C-dc)    BN-scale-folded w1[:, dc:] (untouched channels)
    # shift_ref: (Hd, 1)       BN shift = beta - mean * scale
    # w2_ref:    (C, Hd)       second 1x1-conv weight (layer_scale folded in if present)
    # out_ref:   (1, C,  HW)
    x = x_ref[0]                                   # (C, HW)  shortcut
    x1 = x[:dc, :]                                 # (dc, HW) channels seen by the 3x3 conv
    xb = x[dc:, :]                                 # (C-dc, HW) untouched channels
    hw = x1.shape[1]

    # Build the 9 shifted (and border-masked) copies of x1: tap k = (kh, kw),
    # shifted_k[c, p] = x1[c, p + (kh-1)*W + (kw-1)] with zero padding outside the image.
    parts = []
    for k in range(9):
        di, dj = k // 3 - 1, k % 3 - 1
        s = di * W + dj
        v = x1 if s == 0 else pltpu.roll(x1, (-s) % hw, axis=1)   # XLU lane rotate
        if s != 0:
            v = v * mask_ref[pl.ds(k, 1), :]                      # zero the wrapped taps
        parts.append(v)
    stacked = jnp.concatenate(parts, axis=0)       # (9*dc, HW)

    # First 1x1 conv (C -> hidden) with BN scale and the 3x3 conv pre-folded, + BN shift.
    h = (jnp.dot(w1c_ref[...], stacked, preferred_element_type=jnp.float32)
         + jnp.dot(w1b_ref[...], xb, preferred_element_type=jnp.float32)
         + shift_ref[...])                         # (Hd, HW)
    h = jnp.maximum(h, 0.0)                        # act_layer = ReLU

    # Second 1x1 conv (hidden -> C); layer_scale already folded into w2.
    y = jnp.dot(w2_ref[...], h, preferred_element_type=jnp.float32)   # (C, HW)

    # Residual add with the ORIGINAL input (drop_path = Identity at inference).
    out_ref[0] = (x + y).astype(out_ref.dtype)


# ------------------------------- wrapper --------------------------------------
def mlp_block_forward(x, pconv_w, w1, bn_gamma, bn_beta, bn_mean, bn_var, w2,
                      *, n_div, layer_scale=None, eps=1e-5):
    """MLPBlock forward. x: (B, C, H, W) f32 NCHW.
    pconv_w: (dc, dc, 3, 3);  w1: (hidden, C, 1, 1);  w2: (C, hidden, 1, 1);
    BN params/stats: (hidden,). layer_scale: optional (C,)."""
    B, C, H, W = x.shape
    dc = C // n_div
    Hd = w1.shape[0]
    HW = H * W

    # ---- constant folding (all tiny, done once outside the kernel) ----------------
    scale = bn_gamma / jnp.sqrt(bn_var + eps)                          # (Hd,)
    shift = (bn_beta - bn_mean * scale).reshape(Hd, 1)                 # (Hd, 1)
    w1f = w1.reshape(Hd, C) * scale[:, None]                           # (Hd, C)  BN scale folded
    w1a = w1f[:, :dc]                                                  # (Hd, dc)
    w1b = w1f[:, dc:]                                                  # (Hd, C-dc)

    # Fold the 3x3 partial conv into the first matmul:
    #   w1a @ conv3x3(x1) == (w1a @ Wc_mat) @ stack(9 shifted copies of x1)
    # Wc_mat[o, (kh*3+kw)*dc + c] = pconv_w[o, c, kh, kw]
    wc_mat = jnp.transpose(pconv_w, (0, 2, 3, 1)).reshape(dc, 9 * dc)  # (dc, 9*dc)
    w1c = jnp.dot(w1a, wc_mat, precision=lax.Precision.HIGHEST)       # (Hd, 9*dc)

    w2m = w2.reshape(C, Hd)                                            # (C, Hd)
    if layer_scale is not None:
        w2m = w2m * layer_scale[:, None]

    # Border-validity masks for the 9 conv taps (implements the zero padding).
    ii, jj = jnp.meshgrid(jnp.arange(H), jnp.arange(W), indexing="ij")
    masks = []
    for k in range(9):
        di, dj = k // 3 - 1, k % 3 - 1
        valid = (ii + di >= 0) & (ii + di < H) & (jj + dj >= 0) & (jj + dj < W)
        masks.append(valid.reshape(HW))
    mask = jnp.stack(masks, axis=0).astype(x.dtype)                    # (9, HW)

    # ---- NCHW -> (B, C, H*W): free reshape; spatial axis lands on lanes -------------
    x_flat = x.reshape(B, C, HW)

    kernel = functools.partial(_mlp_block_kernel, dc, W)
    out = pl.pallas_call(
        kernel,
        out_shape=jax.ShapeDtypeStruct((B, C, HW), x.dtype),
        grid=(B,),
        in_specs=[
            pl.BlockSpec((1, C, HW), lambda b: (b, 0, 0)),             # x (shortcut)
            pl.BlockSpec((9, HW), lambda b: (0, 0)),                   # border masks
            pl.BlockSpec((Hd, 9 * dc), lambda b: (0, 0)),              # w1 (conv'd cols, 3x3 folded)
            pl.BlockSpec((Hd, C - dc), lambda b: (0, 0)),              # w1 (untouched cols)
            pl.BlockSpec((Hd, 1), lambda b: (0, 0)),                   # BN shift
            pl.BlockSpec((C, Hd), lambda b: (0, 0)),                   # w2
        ],
        out_specs=pl.BlockSpec((1, C, HW), lambda b: (b, 0, 0)),
        compiler_params=pltpu.CompilerParams(
            dimension_semantics=("parallel",),
            vmem_limit_bytes=32 * 1024 * 1024),
    )(x_flat, mask, w1c, w1b, shift, w2m)

    return out.reshape(B, C, H, W)                                     # NCHW, no transpose


# ------------------------------- reference ------------------------------------
def _reference(x, pconv_w, w1, bn_gamma, bn_beta, bn_mean, bn_var, w2,
               *, n_div, layer_scale=None, eps=1e-5):
    B, C, H, W = x.shape
    dc = C // n_div
    Hd = w1.shape[0]
    x1 = lax.conv_general_dilated(
        x[:, :dc], pconv_w, window_strides=(1, 1), padding=((1, 1), (1, 1)),
        dimension_numbers=("NCHW", "OIHW", "NCHW"),
        precision=lax.Precision.HIGHEST)
    xm = jnp.concatenate([x1, x[:, dc:]], axis=1)
    h = jnp.einsum("oc,bchw->bohw", w1.reshape(Hd, C), xm,
                   precision=lax.Precision.HIGHEST)
    h = ((h - bn_mean[None, :, None, None])
         / jnp.sqrt(bn_var + eps)[None, :, None, None]
         * bn_gamma[None, :, None, None] + bn_beta[None, :, None, None])
    h = jnp.maximum(h, 0.0)
    y = jnp.einsum("oc,bchw->bohw", w2.reshape(C, Hd), h,
                   precision=lax.Precision.HIGHEST)
    if layer_scale is not None:
        y = layer_scale[None, :, None, None] * y
    return x + y


# --------------------------------- main ----------------------------------------
if __name__ == "__main__":
    # MLPBlock(dim=32, n_div=4, mlp_ratio=2, drop_path=0.0, layer_scale_init_value=...,
    #          act_layer=nn.ReLU, norm_layer=nn.BatchNorm2d, pconv_fw_type='split_cat')
    dim, n_div, mlp_ratio = 32, 4, 2.0
    hidden = int(dim * mlp_ratio)        # 64
    dc = dim // n_div                    # 8 channels touched by the 3x3 partial conv
    B, H, W = 2, 16, 16

    key = jax.random.PRNGKey(0)
    kx, kp, k1, kg, kb, km, kv, k2, kls = jax.random.split(key, 9)

    x = jax.random.normal(kx, (B, dim, H, W), dtype=jnp.float32)
    # Partial_conv3: Conv2d(dc, dc, 3, stride=1, pad=1, bias=False)
    pconv_w = jax.random.normal(kp, (dc, dc, 3, 3), dtype=jnp.float32) * 0.1
    # mlp[0]: Conv2d(dim, hidden, 1, bias=False)
    w1 = jax.random.normal(k1, (hidden, dim, 1, 1), dtype=jnp.float32) * 0.1
    # mlp[1]: BatchNorm2d(hidden), eval mode (running stats)
    bn_gamma = 1.0 + 0.1 * jax.random.normal(kg, (hidden,), dtype=jnp.float32)
    bn_beta = 0.1 * jax.random.normal(kb, (hidden,), dtype=jnp.float32)
    bn_mean = 0.05 * jax.random.normal(km, (hidden,), dtype=jnp.float32)
    bn_var = 1.0 + 0.1 * jax.random.uniform(kv, (hidden,), dtype=jnp.float32)
    # mlp[3]: Conv2d(hidden, dim, 1, bias=False)
    w2 = jax.random.normal(k2, (dim, hidden, 1, 1), dtype=jnp.float32) * 0.1

    # --- branch 1: layer_scale_init_value == 0 (plain forward) ---
    y = mlp_block_forward(x, pconv_w, w1, bn_gamma, bn_beta, bn_mean, bn_var, w2,
                          n_div=n_div, layer_scale=None)
    y = jax.block_until_ready(y)
    y_ref = jax.block_until_ready(
        _reference(x, pconv_w, w1, bn_gamma, bn_beta, bn_mean, bn_var, w2,
                   n_div=n_div, layer_scale=None))
    assert y.shape == (B, dim, H, W), y.shape
    err0 = float(jnp.max(jnp.abs(y - y_ref)))
    assert jnp.allclose(y, y_ref, atol=1e-4, rtol=1e-4), err0

    # --- branch 2: layer_scale_init_value > 0 (forward_layer_scale) ---
    layer_scale = 1e-2 * (1.0 + 0.5 * jax.random.normal(kls, (dim,), dtype=jnp.float32))
    y2 = jax.block_until_ready(
        mlp_block_forward(x, pconv_w, w1, bn_gamma, bn_beta, bn_mean, bn_var, w2,
                          n_div=n_div, layer_scale=layer_scale))
    y2_ref = jax.block_until_ready(
        _reference(x, pconv_w, w1, bn_gamma, bn_beta, bn_mean, bn_var, w2,
                   n_div=n_div, layer_scale=layer_scale))
    err1 = float(jnp.max(jnp.abs(y2 - y2_ref)))
    assert jnp.allclose(y2, y2_ref, atol=1e-4, rtol=1e-4), err1

    print("KERNEL_OK")
</pallas_src>

<mosaic_0001>
module attributes {stable_mosaic.version = 11 : i64} {
  func.func @_mlp_block_kernel(%arg0: i32, %arg1: memref<1x32x256xf32, #tpu.memory_space<vmem>>, %arg2: memref<9x256xf32, #tpu.memory_space<vmem>>, %arg3: memref<64x72xf32, #tpu.memory_space<vmem>>, %arg4: memref<64x24xf32, #tpu.memory_space<vmem>>, %arg5: memref<64x1xf32, #tpu.memory_space<vmem>>, %arg6: memref<32x64xf32, #tpu.memory_space<vmem>>, %arg7: memref<1x32x256xf32, #tpu.memory_space<vmem>>) attributes {dimension_semantics = [#tpu.dimension_semantics<parallel>], iteration_bounds = array<i64: 2>, scalar_prefetch = 0 : i64, scratch_operands = 0 : i64, tpu.core_type = #tpu.core_type<tc>, window_params = [{transform_indices = @transform_0, window_bounds = array<i64: 1, 32, 256>}, {pipeline_mode = #tpu.pipeline_mode<synchronous>, transform_indices = @transform_1, window_bounds = array<i64: 9, 256>}, {pipeline_mode = #tpu.pipeline_mode<synchronous>, transform_indices = @transform_2, window_bounds = array<i64: 64, 72>}, {pipeline_mode = #tpu.pipeline_mode<synchronous>, transform_indices = @transform_3, window_bounds = array<i64: 64, 24>}, {pipeline_mode = #tpu.pipeline_mode<synchronous>, transform_indices = @transform_4, window_bounds = array<i64: 64, 1>}, {pipeline_mode = #tpu.pipeline_mode<synchronous>, transform_indices = @transform_5, window_bounds = array<i64: 32, 64>}, {transform_indices = @transform_6, window_bounds = array<i64: 1, 32, 256>}]} {
    %c0 = arith.constant 0 : index
    %c0_0 = arith.constant 0 : index
    %c0_1 = arith.constant 0 : index
    %0 = vector.load %arg1[%c0, %c0_0, %c0_1] : memref<1x32x256xf32, #tpu.memory_space<vmem>>, vector<1x32x256xf32>
    %1 = vector.shape_cast %0 : vector<1x32x256xf32> to vector<32x256xf32>
    %2 = vector.extract_strided_slice %1 {offsets = [0, 0], sizes = [8, 256], strides = [1, 1]} : vector<32x256xf32> to vector<8x256xf32>
    %3 = vector.extract_strided_slice %1 {offsets = [8, 0], sizes = [24, 256], strides = [1, 1]} : vector<32x256xf32> to vector<24x256xf32>
    %c17_i32 = arith.constant 17 : i32
    %4 = tpu.dynamic_rotate %2 by %c17_i32 dim 1 : vector<8x256xf32>, i32 -> vector<8x256xf32>
    %c0_2 = arith.constant 0 : index
    %c0_3 = arith.constant 0 : index
    %5 = vector.load %arg2[%c0_2, %c0_3] : memref<9x256xf32, #tpu.memory_space<vmem>>, vector<1x256xf32>
    %6 = vector.broadcast %5 : vector<1x256xf32> to vector<8x256xf32>
    %7 = arith.mulf %4, %6 : vector<8x256xf32>
    %c16_i32 = arith.constant 16 : i32
    %8 = tpu.dynamic_rotate %2 by %c16_i32 dim 1 : vector<8x256xf32>, i32 -> vector<8x256xf32>
    %c1 = arith.constant 1 : index
    %c0_4 = arith.constant 0 : index
    %9 = vector.load %arg2[%c1, %c0_4] : memref<9x256xf32, #tpu.memory_space<vmem>>, vector<1x256xf32>
    %10 = vector.broadcast %9 : vector<1x256xf32> to vector<8x256xf32>
    %11 = arith.mulf %8, %10 : vector<8x256xf32>
    %c15_i32 = arith.constant 15 : i32
    %12 = tpu.dynamic_rotate %2 by %c15_i32 dim 1 : vector<8x256xf32>, i32 -> vector<8x256xf32>
    %c2 = arith.constant 2 : index
    %c0_5 = arith.constant 0 : index
    %13 = vector.load %arg2[%c2, %c0_5] : memref<9x256xf32, #tpu.memory_space<vmem>>, vector<1x256xf32>
    %14 = vector.broadcast %13 : vector<1x256xf32> to vector<8x256xf32>
    %15 = arith.mulf %12, %14 : vector<8x256xf32>
    %c1_i32 = arith.constant 1 : i32
    %16 = tpu.dynamic_rotate %2 by %c1_i32 dim 1 : vector<8x256xf32>, i32 -> vector<8x256xf32>
    %c3 = arith.constant 3 : index
    %c0_6 = arith.constant 0 : index
    %17 = vector.load %arg2[%c3, %c0_6] : memref<9x256xf32, #tpu.memory_space<vmem>>, vector<1x256xf32>
    %18 = vector.broadcast %17 : vector<1x256xf32> to vector<8x256xf32>
    %19 = arith.mulf %16, %18 : vector<8x256xf32>
    %c255_i32 = arith.constant 255 : i32
    %20 = tpu.dynamic_rotate %2 by %c255_i32 dim 1 : vector<8x256xf32>, i32 -> vector<8x256xf32>
    %c5 = arith.constant 5 : index
    %c0_7 = arith.constant 0 : index
    %21 = vector.load %arg2[%c5, %c0_7] : memref<9x256xf32, #tpu.memory_space<vmem>>, vector<1x256xf32>
    %22 = vector.broadcast %21 : vector<1x256xf32> to vector<8x256xf32>
    %23 = arith.mulf %20, %22 : vector<8x256xf32>
    %c241_i32 = arith.constant 241 : i32
    %24 = tpu.dynamic_rotate %2 by %c241_i32 dim 1 : vector<8x256xf32>, i32 -> vector<8x256xf32>
    %c6 = arith.constant 6 : index
    %c0_8 = arith.constant 0 : index
    %25 = vector.load %arg2[%c6, %c0_8] : memref<9x256xf32, #tpu.memory_space<vmem>>, vector<1x256xf32>
    %26 = vector.broadcast %25 : vector<1x256xf32> to vector<8x256xf32>
    %27 = arith.mulf %24, %26 : vector<8x256xf32>
    %c240_i32 = arith.constant 240 : i32
    %28 = tpu.dynamic_rotate %2 by %c240_i32 dim 1 : vector<8x256xf32>, i32 -> vector<8x256xf32>
    %c7 = arith.constant 7 : index
    %c0_9 = arith.constant 0 : index
    %29 = vector.load %arg2[%c7, %c0_9] : memref<9x256xf32, #tpu.memory_space<vmem>>, vector<1x256xf32>
    %30 = vector.broadcast %29 : vector<1x256xf32> to vector<8x256xf32>
    %31 = arith.mulf %28, %30 : vector<8x256xf32>
    %c239_i32 = arith.constant 239 : i32
    %32 = tpu.dynamic_rotate %2 by %c239_i32 dim 1 : vector<8x256xf32>, i32 -> vector<8x256xf32>
    %c8 = arith.constant 8 : index
    %c0_10 = arith.constant 0 : index
    %33 = vector.load %arg2[%c8, %c0_10] : memref<9x256xf32, #tpu.memory_space<vmem>>, vector<1x256xf32>
    %34 = vector.broadcast %33 : vector<1x256xf32> to vector<8x256xf32>
    %35 = arith.mulf %32, %34 : vector<8x256xf32>
    %36 = tpu.concatenate %7, %11, %15, %19, %2, %23, %27, %31, %35 in 0 : vector<8x256xf32>, vector<8x256xf32>, vector<8x256xf32>, vector<8x256xf32>, vector<8x256xf32>, vector<8x256xf32>, vector<8x256xf32>, vector<8x256xf32>, vector<8x256xf32> -> vector<72x256xf32>
    %c0_11 = arith.constant 0 : index
    %c0_12 = arith.constant 0 : index
    %37 = vector.load %arg3[%c0_11, %c0_12] : memref<64x72xf32, #tpu.memory_space<vmem>>, vector<64x72xf32>
    %cst = arith.constant dense<0.000000e+00> : vector<64x256xf32>
    %38 = tpu.matmul %37, %36, %cst {dimension_numbers = #tpu.dot_dimension_numbers<[1], [0], [0], [1], [0, 0, 1, 1], [], []>} : vector<64x72xf32>, vector<72x256xf32>, vector<64x256xf32> -> vector<64x256xf32>
    %c0_13 = arith.constant 0 : index
    %c0_14 = arith.constant 0 : index
    %39 = vector.load %arg4[%c0_13, %c0_14] : memref<64x24xf32, #tpu.memory_space<vmem>>, vector<64x24xf32>
    %cst_15 = arith.constant dense<0.000000e+00> : vector<64x256xf32>
    %40 = tpu.matmul %39, %3, %cst_15 {dimension_numbers = #tpu.dot_dimension_numbers<[1], [0], [0], [1], [0, 0, 1, 1], [], []>} : vector<64x24xf32>, vector<24x256xf32>, vector<64x256xf32> -> vector<64x256xf32>
    %41 = arith.addf %38, %40 : vector<64x256xf32>
    %c0_16 = arith.constant 0 : index
    %c0_17 = arith.constant 0 : index
    %42 = vector.load %arg5[%c0_16, %c0_17] : memref<64x1xf32, #tpu.memory_space<vmem>>, vector<64x1xf32>
    %43 = vector.broadcast %42 : vector<64x1xf32> to vector<64x256xf32>
    %44 = arith.addf %41, %43 : vector<64x256xf32>
    %cst_18 = arith.constant 0.000000e+00 : f32
    %45 = vector.broadcast %cst_18 : f32 to vector<64x256xf32>
    %46 = arith.maximumf %44, %45 : vector<64x256xf32>
    %c0_19 = arith.constant 0 : index
    %c0_20 = arith.constant 0 : index
    %47 = vector.load %arg6[%c0_19, %c0_20] : memref<32x64xf32, #tpu.memory_space<vmem>>, vector<32x64xf32>
    %cst_21 = arith.constant dense<0.000000e+00> : vector<32x256xf32>
    %48 = tpu.matmul %47, %46, %cst_21 {dimension_numbers = #tpu.dot_dimension_numbers<[1], [0], [0], [1], [0, 0, 1, 1], [], []>} : vector<32x64xf32>, vector<64x256xf32>, vector<32x256xf32> -> vector<32x256xf32>
    %49 = arith.addf %1, %48 : vector<32x256xf32>
    %c0_22 = arith.constant 0 : index
    %c0_23 = arith.constant 0 : index
    %c0_24 = arith.constant 0 : index
    %50 = vector.load %arg7[%c0_22, %c0_23, %c0_24] : memref<1x32x256xf32, #tpu.memory_space<vmem>>, vector<1x32x256xf32>
    %51 = vector.shape_cast %50 : vector<1x32x256xf32> to vector<32x256xf32>
    %52 = vector.shape_cast %49 : vector<32x256xf32> to vector<1x32x256xf32>
    tpu.vector_store %arg7[%c0_22, %c0_23, %c0_24], %52 {strides = array<i32>} : memref<1x32x256xf32, #tpu.memory_space<vmem>>, vector<1x32x256xf32>,
    return
  }
  func.func @transform_0(%arg0: i32) -> (i32, i32, i32) {
    %c0_i32 = arith.constant 0 : i32
    %c0_i32_0 = arith.constant 0 : i32
    %c0_i32_1 = arith.constant 0 : i32
    return %arg0, %c0_i32, %c0_i32_0 : i32, i32, i32
  }
  func.func @transform_1(%arg0: i32) -> (i32, i32) {
    %c0_i32 = arith.constant 0 : i32
    %c0_i32_0 = arith.constant 0 : i32
    %c0_i32_1 = arith.constant 0 : i32
    return %c0_i32, %c0_i32_0 : i32, i32
  }
  func.func @transform_2(%arg0: i32) -> (i32, i32) {
    %c0_i32 = arith.constant 0 : i32
    %c0_i32_0 = arith.constant 0 : i32
    %c0_i32_1 = arith.constant 0 : i32
    return %c0_i32, %c0_i32_0 : i32, i32
  }
  func.func @transform_3(%arg0: i32) -> (i32, i32) {
    %c0_i32 = arith.constant 0 : i32
    %c0_i32_0 = arith.constant 0 : i32
    %c0_i32_1 = arith.constant 0 : i32
    return %c0_i32, %c0_i32_0 : i32, i32
  }
  func.func @transform_4(%arg0: i32) -> (i32, i32) {
    %c0_i32 = arith.constant 0 : i32
    %c0_i32_0 = arith.constant 0 : i32
    %c0_i32_1 = arith.constant 0 : i32
    return %c0_i32, %c0_i32_0 : i32, i32
  }
  func.func @transform_5(%arg0: i32) -> (i32, i32) {
    %c0_i32 = arith.constant 0 : i32
    %c0_i32_0 = arith.constant 0 : i32
    %c0_i32_1 = arith.constant 0 : i32
    return %c0_i32, %c0_i32_0 : i32, i32
  }
  func.func @transform_6(%arg0: i32) -> (i32, i32, i32) {
    %c0_i32 = arith.constant 0 : i32
    %c0_i32_0 = arith.constant 0 : i32
    %c0_i32_1 = arith.constant 0 : i32
    return %arg0, %c0_i32, %c0_i32_0 : i32, i32, i32
  }
}

</mosaic_0001>

<llo_original>
// kernel: tpu_custom_call.1
$region0: #{tpu_custom_call.1}
  #allocation0 [shape = 'u32[]', space=smem, size = 0x4, offset = 0x4, fixed_abs, tag = 'smem constant byte address 0x4 - core index']
  #allocation1 [shape = 'u32[144,128]{1,0:T(1,128)}', space=vmem, size = 0x12000, scoped, tag = 'internal scratch']
  %s0 = inlined_call_operand.vmem [shape: f32[2,32,256], index: 0, kind: input, shape index: {}]
  %s1 = inlined_call_operand.hbm [shape: f32[9,256], index: 1, kind: input, shape index: {}]
  %s2 = inlined_call_operand.hbm [shape: f32[64,72], index: 2, kind: input, shape index: {}]
  %s3 = inlined_call_operand.vmem [shape: f32[64,24], index: 3, kind: input, shape index: {}]
  %s4 = inlined_call_operand.vmem [shape: f32[64,1], index: 4, kind: input, shape index: {}]
  %s5 = inlined_call_operand.vmem [shape: f32[32,64], index: 5, kind: input, shape index: {}]
  %s6 = inlined_call_operand.hbm [shape: f32[2,32,256], index: 6, kind: output, shape index: {}]
  %s7 = sld [smem:[#allocation0]]
  $region65: #{tpu_custom_call.1} parent=0
    _
  %s9 = ssub.s32 1, %s7
  %s10 = scalar_select 0, %s9, %s7
  $region1: #{tpu_custom_call.1} parent=0
    #allocation2 [shape = 'u8[16384]{0}', space=vmem, size = 0x4000, scoped, tag = 'input window, operand 1, single buffered']
    #allocation3 [shape = 's32[2]{0}', space=sflag, size = 0x8, scoped, tag = 'scoped memory for tpu_custom_call.1']
    #allocation4 [shape = 's32[2]{0}', space=sflag, size = 0x8, scoped, tag = 'scoped memory for tpu_custom_call.1']
    #allocation5 [shape = 'u8[32768]{0}', space=vmem, size = 0x8000, scoped, tag = 'input window, operand 2, single buffered']
    #allocation6 [shape = 's32[1]{0}', space=sflag, size = 0x4, scoped, tag = 'scoped memory for tpu_custom_call.1']
    #allocation7 [shape = 'u8[65536]{0}', space=vmem, size = 0x10000, scoped, tag = 'output window, operand 0']
    %11 = vsyncpa [#allocation3], 0
    %12 = vsyncpa [#allocation6], 0
    %13 = vsyncpa [#allocation4], 0
    %s14 = scalar_lea.sflag [#allocation4], 1
    %15 = vsyncpa %s14, 0
    loop: start=0, step=1, limit=4
    $region2: #{tpu_custom_call.1} parent=1 // loop_pre_header
      _
    $region3: #{tpu_custom_call.1} parent=1 // loop_header
      %s17 = sphi 0, %s21
      %p18 = scmp.ge.s32.totalorder %s17, 4
      %s27 = sphi 0, %s29
      %s30 = sphi 0, %s27
      %s31 = sphi 0, %s30
      %s47 = sphi 0, %s31
      %s51 = sphi 0, %s51
      %s53 = sphi 0, %s51
      %s54 = sphi 0, %s53
      %s68 = sphi 0, %s54
      %s72 = sphi 0, %s72
      %s74 = sphi 0, %s72
      %s75 = sphi 0, %s74
      %s89 = sphi 0, %s75
      %s93 = sphi 0, %s93
      %s95 = sphi 0, %s93
      %s96 = sphi 0, %s95
      %s110 = sphi 0, %s96
      %s114 = sphi 0, %s114
      %s116 = sphi 0, %s114
      %s117 = sphi 0, %s116
      %s131 = sphi 0, %s117
      %s135 = sphi 0, %s135
      %s137 = sphi 0, %s135
      %s138 = sphi 0, %s137
      %s152 = sphi 0, %s138
      %s158 = sphi 0, %s160
      %s161 = sphi 0, %s158
      %s162 = sphi 0, %s161
      %s178 = sphi 0, %s162
    $region4: #{tpu_custom_call.1} parent=1 // loop_header_branch
      %20 = sbr.rel (%p18) target = $region8
    $region5: #{tpu_custom_call.1} parent=1 // loop_body
      %s22 = ssub.s32 %s17, 1
      %s23 = ssub.s32 %s17, 2
      %s24 = sadd.s32 %s17, 1
      %s25 = ssub.s32 %s17, %s24
      %p26 = scmp.eq.s32.totalorder %s25, 0
      %s28 = sadd.s32 %s27, 1
      %s29 = scalar_select %p26, %s27, %s28
      %p32 = pneg %p26
      %p33 = scmp.eq.s32.totalorder %s17, 1
      %p34 = por %p32, %p33
      %p35 = scmp.ne.s32.totalorder %s27, %s30
      %p36 = scmp.eq.s32.totalorder %s17, 0
      %p37 = por %p35, %p36
      %p38 = scmp.ne.s32.totalorder %s27, %s30
      %p39 = scmp.eq.s32.totalorder %s22, 1
      %p40 = por %p38, %p39
      %p41 = scmp.ne.s32.totalorder %s30, %s31
      %p42 = scmp.eq.s32.totalorder %s22, 0
      %p43 = por %p41, %p42
      %p44 = scmp.ne.s32.totalorder %s30, %s31
      %p45 = scmp.eq.s32.totalorder %s23, 1
      %p46 = por %p44, %p45
      %p48 = scmp.ne.s32.totalorder %s31, %s47
      %p49 = scmp.eq.s32.totalorder %s23, 0
      %p50 = por %p48, %p49
      %s52 = sadd.s32 %s51, 1
      %p55 = scmp.eq.s32.totalorder %s17, 1
      %p56 = scmp.ne.s32.totalorder %s51, %s53
      %p57 = scmp.eq.s32.totalorder %s17, 0
      %p58 = por %p56, %p57
      %p59 = scmp.ne.s32.totalorder %s51, %s53
      %p60 = scmp.eq.s32.totalorder %s22, 1
      %p61 = por %p59, %p60
      %p62 = scmp.ne.s32.totalorder %s53, %s54
      %p63 = scmp.eq.s32.totalorder %s22, 0
      %p64 = por %p62, %p63
      %p65 = scmp.ne.s32.totalorder %s53, %s54
      %p66 = scmp.eq.s32.totalorder %s23, 1
      %p67 = por %p65, %p66
      %p69 = scmp.ne.s32.totalorder %s54, %s68
      %p70 = scmp.eq.s32.totalorder %s23, 0
      %p71 = por %p69, %p70
      %s73 = sadd.s32 %s72, 1
      %p76 = scmp.eq.s32.totalorder %s17, 1
      %p77 = scmp.ne.s32.totalorder %s72, %s74
      %p78 = scmp.eq.s32.totalorder %s17, 0
      %p79 = por %p77, %p78
      %p80 = scmp.ne.s32.totalorder %s72, %s74
      %p81 = scmp.eq.s32.totalorder %s22, 1
      %p82 = por %p80, %p81
      %p83 = scmp.ne.s32.totalorder %s74, %s75
      %p84 = scmp.eq.s32.totalorder %s22, 0
      %p85 = por %p83, %p84
      %p86 = scmp.ne.s32.totalorder %s74, %s75
      %p87 = scmp.eq.s32.totalorder %s23, 1
      %p88 = por %p86, %p87
      %p90 = scmp.ne.s32.totalorder %s75, %s89
      %p91 = scmp.eq.s32.totalorder %s23, 0
      %p92 = por %p90, %p91
      %s94 = sadd.s32 %s93, 1
      %p97 = scmp.eq.s32.totalorder %s17, 1
      %p98 = scmp.ne.s32.totalorder %s93, %s95
      %p99 = scmp.eq.s32.totalorder %s17, 0
      %p100 = por %p98, %p99
      %p101 = scmp.ne.s32.totalorder %s93, %s95
      %p102 = scmp.eq.s32.totalorder %s22, 1
      %p103 = por %p101, %p102
      %p104 = scmp.ne.s32.totalorder %s95, %s96
      %p105 = scmp.eq.s32.totalorder %s22, 0
      %p106 = por %p104, %p105
      %p107 = scmp.ne.s32.totalorder %s95, %s96
      %p108 = scmp.eq.s32.totalorder %s23, 1
      %p109 = por %p107, %p108
      %p111 = scmp.ne.s32.totalorder %s96, %s110
      %p112 = scmp.eq.s32.totalorder %s23, 0
      %p113 = por %p111, %p112
      %s115 = sadd.s32 %s114, 1
      %p118 = scmp.eq.s32.totalorder %s17, 1
      %p119 = scmp.ne.s32.totalorder %s114, %s116
      %p120 = scmp.eq.s32.totalorder %s17, 0
      %p121 = por %p119, %p120
      %p122 = scmp.ne.s32.totalorder %s114, %s116
      %p123 = scmp.eq.s32.totalorder %s22, 1
      %p124 = por %p122, %p123
      %p125 = scmp.ne.s32.totalorder %s116, %s117
      %p126 = scmp.eq.s32.totalorder %s22, 0
      %p127 = por %p125, %p126
      %p128 = scmp.ne.s32.totalorder %s116, %s117
      %p129 = scmp.eq.s32.totalorder %s23, 1
      %p130 = por %p128, %p129
      %p132 = scmp.ne.s32.totalorder %s117, %s131
      %p133 = scmp.eq.s32.totalorder %s23, 0
      %p134 = por %p132, %p133
      %s136 = sadd.s32 %s135, 1
      %p139 = scmp.eq.s32.totalorder %s17, 1
      %p140 = scmp.ne.s32.totalorder %s135, %s137
      %p141 = scmp.eq.s32.totalorder %s17, 0
      %p142 = por %p140, %p141
      %p143 = scmp.ne.s32.totalorder %s135, %s137
      %p144 = scmp.eq.s32.totalorder %s22, 1
      %p145 = por %p143, %p144
      %p146 = scmp.ne.s32.totalorder %s137, %s138
      %p147 = scmp.eq.s32.totalorder %s22, 0
      %p148 = por %p146, %p147
      %p149 = scmp.ne.s32.totalorder %s137, %s138
      %p150 = scmp.eq.s32.totalorder %s23, 1
      %p151 = por %p149, %p150
      %p153 = scmp.ne.s32.totalorder %s138, %s152
      %p154 = scmp.eq.s32.totalorder %s23, 0
      %p155 = por %p153, %p154
      %s156 = ssub.s32 %s17, %s24
      %p157 = scmp.eq.s32.totalorder %s156, 0
      %s159 = sadd.s32 %s158, 1
      %s160 = scalar_select %p157, %s158, %s159
      %p163 = pneg %p157
      %p164 = scmp.eq.s32.totalorder %s17, 1
      %p165 = por %p163, %p164
      %p166 = scmp.ne.s32.totalorder %s158, %s161
      %p167 = scmp.eq.s32.totalorder %s17, 0
      %p168 = por %p166, %p167
      %p169 = scmp.ne.s32.totalorder %s158, %s161
      %p170 = scmp.eq.s32.totalorder %s22, 1
      %p171 = por %p169, %p170
      %p172 = scmp.ne.s32.totalorder %s161, %s162
      %p173 = scmp.eq.s32.totalorder %s22, 0
      %p174 = por %p172, %p173
      %p175 = scmp.ne.s32.totalorder %s161, %s162
      %p176 = scmp.eq.s32.totalorder %s23, 1
      %p177 = por %p175, %p176
      %p179 = scmp.ne.s32.totalorder %s162, %s178
      %p180 = scmp.eq.s32.totalorder %s23, 0
      %p181 = por %p179, %p180
      %p182 = scmp.le.s32.totalorder 1, %s17
      %p183 = scmp.lt.s32.totalorder %s17, 3
      %p184 = pnand %p182, %p183
      %p185 = pneg %p184
      // Predicated region
      $region9: #{tpu_custom_call.1} parent=5 // pred_check
        _
      $region10: #{tpu_custom_call.1} parent=5 // pred_check_branch
        %187 = sbr.rel (%p184) target = $region12
      $region11: #{tpu_custom_call.1} parent=5 // pred_region
        %s188 = ssub.s32 %s17, 1
        // Predicated region
        $region13: #{tpu_custom_call.1} parent=11 // pred_check
          %p189 = pneg %p64
        $region14: #{tpu_custom_call.1} parent=11 // pred_check_branch
          %191 = sbr.rel (%p189) target = $region16
        $region15: #{tpu_custom_call.1} parent=11 // pred_region
          %s193 = ssub.s32 512, 512
          %194 = vsyncadd [#allocation3], %s193
          %s195 = sshll.u32 [#allocation2], 4
          %s196 = int_to_ptr.vmem [resolvable:$true] %s195
          %201 = dma.hbm_to_vmem [thread:$0]  %s1, 512, %s196, [#allocation3], 256, 256, 16
        $region16: #{tpu_custom_call.1} parent=11 // pred_fallthru
          _
        // Predicated region
        $region17: #{tpu_custom_call.1} parent=11 // pred_check
          %p202 = pneg %p85
        $region18: #{tpu_custom_call.1} parent=11 // pred_check_branch
          %204 = sbr.rel (%p202) target = $region20
        $region19: #{tpu_custom_call.1} parent=11 // pred_region
          %s206 = ssub.s32 1024, 1024
          %207 = vsyncadd [#allocation6], %s206
          %s208 = sshll.u32 [#allocation5], 4
          %s209 = int_to_ptr.vmem [resolvable:$true] %s208
          %214 = dma.hbm_to_vmem [thread:$0]  %s2, 1024, %s209, [#allocation6], 128, 128, 8
        $region20: #{tpu_custom_call.1} parent=11 // pred_fallthru
          _
        // Predicated region
        $region21: #{tpu_custom_call.1} parent=11 // pred_check
          %p215 = pneg %p106
        $region22: #{tpu_custom_call.1} parent=11 // pred_check_branch
          %217 = sbr.rel (%p215) target = $region24
        $region23: #{tpu_custom_call.1} parent=11 // pred_region
          _
        $region24: #{tpu_custom_call.1} parent=11 // pred_fallthru
          _
        // Predicated region
        $region25: #{tpu_custom_call.1} parent=11 // pred_check
          %p218 = pneg %p127
        $region26: #{tpu_custom_call.1} parent=11 // pred_check_branch
          %220 = sbr.rel (%p218) target = $region28
        $region27: #{tpu_custom_call.1} parent=11 // pred_region
          _
        $region28: #{tpu_custom_call.1} parent=11 // pred_fallthru
          _
        // Predicated region
        $region29: #{tpu_custom_call.1} parent=11 // pred_check
          %p221 = pneg %p148
        $region30: #{tpu_custom_call.1} parent=11 // pred_check_branch
          %223 = sbr.rel (%p221) target = $region32
        $region31: #{tpu_custom_call.1} parent=11 // pred_region
          _
        $region32: #{tpu_custom_call.1} parent=11 // pred_fallthru
          _
      $region12: #{tpu_custom_call.1} parent=5 // pred_fallthru
        _
      %p224 = scmp.lt.s32.totalorder %s17, 2
      // Predicated region
      $region33: #{tpu_custom_call.1} parent=5 // pred_check
        %p225 = pneg %p224
      $region34: #{tpu_custom_call.1} parent=5 // pred_check_branch
        %227 = sbr.rel (%p225) target = $region36
      $region35: #{tpu_custom_call.1} parent=5 // pred_region
        // Predicated region
        $region37: #{tpu_custom_call.1} parent=35 // pred_check
          %p228 = pneg %p37
        $region38: #{tpu_custom_call.1} parent=35 // pred_check_branch
          %230 = sbr.rel (%p228) target = $region40
        $region39: #{tpu_custom_call.1} parent=35 // pred_region
          %p231 = scmp.lt.s32.totalorder %s17, 1
          %s232 = scalar_select %p231, %s17, 1
          %s233 = smul.addr %s232, 8
          %s234 = smul.addr %s233, 8
          %s235 = scalar_lea.vmem %s0, %s234
        $region40: #{tpu_custom_call.1} parent=35 // pred_fallthru
          _
      $region36: #{tpu_custom_call.1} parent=5 // pred_fallthru
        _
      %p236 = scmp.le.s32.totalorder 1, %s17
      %p237 = scmp.lt.s32.totalorder %s17, 3
      %p238 = pnand %p236, %p237
      %p239 = pneg %p238
      // Predicated region
      $region41: #{tpu_custom_call.1} parent=5 // pred_check
        _
      $region42: #{tpu_custom_call.1} parent=5 // pred_check_branch
        %241 = sbr.rel (%p238) target = $region44
      $region43: #{tpu_custom_call.1} parent=5 // pred_region
        %s242 = ssub.s32 %s17, 1
        // Predicated region
        $region45: #{tpu_custom_call.1} parent=43 // pred_check
          %p243 = pneg %p64
        $region46: #{tpu_custom_call.1} parent=43 // pred_check_branch
          %245 = sbr.rel (%p243) target = $region48
        $region47: #{tpu_custom_call.1} parent=43 // pred_region
          %246 = dma.done [#allocation3], 512
        $region48: #{tpu_custom_call.1} parent=43 // pred_fallthru
          _
        // Predicated region
        $region49: #{tpu_custom_call.1} parent=43 // pred_check
          %p247 = pneg %p85
        $region50: #{tpu_custom_call.1} parent=43 // pred_check_branch
          %249 = sbr.rel (%p247) target = $region52
        $region51: #{tpu_custom_call.1} parent=43 // pred_region
          %250 = dma.done [#allocation6], 1024
        $region52: #{tpu_custom_call.1} parent=43 // pred_fallthru
          _
        %p251 = scmp.lt.s32.totalorder %s22, 1
        %s252 = scalar_select %p251, %s22, 1
        %s253 = smul.addr %s252, 8
        %s254 = smul.addr %s253, 8
        %s255 = scalar_lea.vmem %s0, %s254
        %p256 = pneg %p43
        %p257 = pneg %p40
        %p258 = pneg %p64
        %p259 = pneg %p61
        %p260 = pneg %p85
        %p261 = pneg %p82
        %p262 = pneg %p106
        %p263 = pneg %p103
        %p264 = pneg %p127
        %p265 = pneg %p124
        %p266 = pneg %p148
        %p267 = pneg %p145
        %p268 = pneg %p174
        %p269 = pneg %p171
        %s270 = sand.u32 %s161, 1
        %s271 = scalar_lea.sflag [#allocation4], %s270
        %s272 = sand.u32 %s161, 1
        %s273 = smul.addr %s272, 64
        %s274 = scalar_lea.vmem [#allocation7], %s273
        %p275 = scmp.lt.s32.totalorder %s22, 1
        %s276 = scalar_select %p275, %s22, 1
        %s277 = smul.addr %s276, 8
        %s278 = smul.addr %s277, 8
        %s279 = scalar_lea.vmem %s0, %s278
        %v280 = vld [vmem:[%s279] sm:$0xff]
        %v281 = vld [vmem:[%s279 + $0x8] sm:$0xff]
        %v282 = vld [vmem:[%s279 + $0x10] sm:$0xff]
        %v283 = vld [vmem:[%s279 + $0x18] sm:$0xff]
        %v284 = vld [vmem:[%s279 + $0x20] sm:$0xff]
        %v285 = vld [vmem:[%s279 + $0x28] sm:$0xff]
        %v286 = vld [vmem:[%s279 + $0x30] sm:$0xff]
        %v287 = vld [vmem:[%s279 + $0x38] sm:$0xff]
        %288 = vrot.lane.b32.xlu0 %v280, 17
        %v289 = vpop.permute.xlu0 %288
        %290 = vrot.lane.b32.xlu0 %v281, 17
        %v291 = vpop.permute.xlu0 %290
        %v292 = vlaneseq
        %v293 = vand.u32 %v292, 127
        %vm294 = vcmp.lt.s32.totalorder %v293, 17
        %v295 = vsel %vm294, %v289, %v291
        %v296 = vsel %vm294, %v291, %v289
        %v297 = vld [vmem:[#allocation2] ss:$8 sm:$0x3]
        %v299 = vlaneseq
        %v300 = vshrl.u32 %v299, 7
        %v301 = vsub.s32 0, %v300
        %v302 = vrot.slane %v297, %v301
        %v303 = vlaneseq
        %v304 = vshrl.u32 %v303, 7
        %v305 = vsub.s32 1, %v304
        %v306 = vrot.slane %v297, %v305
        %v309 = vmul.f32 %v296, %v302
        %v310 = vmul.f32 %v295, %v306
        %311 = vrot.lane.b32.xlu0 %v280, 16
        %v312 = vpop.permute.xlu0 %311
        %313 = vrot.lane.b32.xlu0 %v281, 16
        %v314 = vpop.permute.xlu0 %313
        %vm315 = vcmp.lt.s32.totalorder %v293, 16
        %v316 = vsel %vm315, %v312, %v314
        %v317 = vsel %vm315, %v314, %v312
        %s318 = scalar_lea.vmem [#allocation2], 1
        %v319 = vld [vmem:[%s318] ss:$8 sm:$0x3]
        %v321 = vlaneseq
        %v322 = vshrl.u32 %v321, 7
        %v323 = vsub.s32 0, %v322
        %v324 = vrot.slane %v319, %v323
        %v325 = vlaneseq
        %v326 = vshrl.u32 %v325, 7
        %v327 = vsub.s32 1, %v326
        %v328 = vrot.slane %v319, %v327
        %v331 = vmul.f32 %v317, %v324
        %v332 = vmul.f32 %v316, %v328
        %333 = vrot.lane.b32.xlu0 %v280, 15
        %v334 = vpop.permute.xlu0 %333
        %335 = vrot.lane.b32.xlu0 %v281, 15
        %v336 = vpop.permute.xlu0 %335
        %vm337 = vcmp.lt.s32.totalorder %v293, 15
        %v338 = vsel %vm337, %v334, %v336
        %v339 = vsel %vm337, %v336, %v334
        %s340 = scalar_lea.vmem [#allocation2], 2
        %v341 = vld [vmem:[%s340] ss:$8 sm:$0x3]
        %v343 = vlaneseq
        %v344 = vshrl.u32 %v343, 7
        %v345 = vsub.s32 0, %v344
        %v346 = vrot.slane %v341, %v345
        %v347 = vlaneseq
        %v348 = vshrl.u32 %v347, 7
        %v349 = vsub.s32 1, %v348
        %v350 = vrot.slane %v341, %v349
        %v353 = vmul.f32 %v339, %v346
        %v354 = vmul.f32 %v338, %v350
        %355 = vrot.lane.b32.xlu0 %v280, 1
        %v356 = vpop.permute.xlu0 %355
        %357 = vrot.lane.b32.xlu0 %v281, 1
        %v358 = vpop.permute.xlu0 %357
        %vm359 = vcmp.lt.s32.totalorder %v293, 1
        %v360 = vsel %vm359, %v356, %v358
        %v361 = vsel %vm359, %v358, %v356
        %s362 = scalar_lea.vmem [#allocation2], 3
        %v363 = vld [vmem:[%s362] ss:$8 sm:$0x3]
        %v365 = vlaneseq
        %v366 = vshrl.u32 %v365, 7
        %v367 = vsub.s32 0, %v366
        %v368 = vrot.slane %v363, %v367
        %v369 = vlaneseq
        %v370 = vshrl.u32 %v369, 7
        %v371 = vsub.s32 1, %v370
        %v372 = vrot.slane %v363, %v371
        %v375 = vmul.f32 %v361, %v368
        %v376 = vmul.f32 %v360, %v372
        %377 = vrot.lane.b32.xlu0 %v280, 127
        %v378 = vpop.permute.xlu0 %377
        %379 = vrot.lane.b32.xlu0 %v281, 127
        %v380 = vpop.permute.xlu0 %379
        %vm381 = vcmp.lt.s32.totalorder %v293, 127
        %v382 = vsel %vm381, %v378, %v380
        %v383 = vsel %vm381, %v380, %v378
        %s384 = scalar_lea.vmem [#allocation2], 5
        %v385 = vld [vmem:[%s384] ss:$8 sm:$0x3]
        %v387 = vlaneseq
        %v388 = vshrl.u32 %v387, 7
        %v389 = vsub.s32 0, %v388
        %v390 = vrot.slane %v385, %v389
        %v391 = vlaneseq
        %v392 = vshrl.u32 %v391, 7
        %v393 = vsub.s32 1, %v392
        %v394 = vrot.slane %v385, %v393
        %v397 = vmul.f32 %v382, %v390
        %v398 = vmul.f32 %v383, %v394
        %399 = vrot.lane.b32.xlu0 %v280, 113
        %v400 = vpop.permute.xlu0 %399
        %401 = vrot.lane.b32.xlu0 %v281, 113
        %v402 = vpop.permute.xlu0 %401
        %vm403 = vcmp.lt.s32.totalorder %v293, 113
        %v404 = vsel %vm403, %v400, %v402
        %v405 = vsel %vm403, %v402, %v400
        %s406 = scalar_lea.vmem [#allocation2], 6
        %v407 = vld [vmem:[%s406] ss:$8 sm:$0x3]
        %v409 = vlaneseq
        %v410 = vshrl.u32 %v409, 7
        %v411 = vsub.s32 0, %v410
        %v412 = vrot.slane %v407, %v411
        %v413 = vlaneseq
        %v414 = vshrl.u32 %v413, 7
        %v415 = vsub.s32 1, %v414
        %v416 = vrot.slane %v407, %v415
        %v419 = vmul.f32 %v404, %v412
        %v420 = vmul.f32 %v405, %v416
        %421 = vrot.lane.b32.xlu0 %v280, 112
        %v422 = vpop.permute.xlu0 %421
        %423 = vrot.lane.b32.xlu0 %v281, 112
        %v424 = vpop.permute.xlu0 %423
        %vm425 = vcmp.lt.s32.totalorder %v293, 112
        %v426 = vsel %vm425, %v422, %v424
        %v427 = vsel %vm425, %v424, %v422
        %s428 = scalar_lea.vmem [#allocation2], 7
        %v429 = vld [vmem:[%s428] ss:$8 sm:$0x3]
        %v431 = vlaneseq
        %v432 = vshrl.u32 %v431, 7
        %v433 = vsub.s32 0, %v432
        %v434 = vrot.slane %v429, %v433
        %v435 = vlaneseq
        %v436 = vshrl.u32 %v435, 7
        %v437 = vsub.s32 1, %v436
        %v438 = vrot.slane %v429, %v437
        %v441 = vmul.f32 %v426, %v434
        %v442 = vmul.f32 %v427, %v438
        %443 = vrot.lane.b32.xlu0 %v280, 111
        %v444 = vpop.permute.xlu0 %443
        %445 = vrot.lane.b32.xlu0 %v281, 111
        %v446 = vpop.permute.xlu0 %445
        %vm447 = vcmp.lt.s32.totalorder %v293, 111
        %v448 = vsel %vm447, %v444, %v446
        %v449 = vsel %vm447, %v446, %v444
        %s450 = scalar_lea.vmem [#allocation2], 16
        %v451 = vld [vmem:[%s450] ss:$8 sm:$0x3]
        %v453 = vlaneseq
        %v454 = vshrl.u32 %v453, 7
        %v455 = vsub.s32 0, %v454
        %v456 = vrot.slane %v451, %v455
        %v457 = vlaneseq
        %v458 = vshrl.u32 %v457, 7
        %v459 = vsub.s32 1, %v458
        %v460 = vrot.slane %v451, %v459
        %v463 = vmul.f32 %v448, %v456
        %v464 = vmul.f32 %v449, %v460
        %v465 = vld [vmem:[#allocation5] sm:$0xff]
        %v466 = vld [vmem:[#allocation5 + $0x8] sm:$0xff]
        %v467 = vld [vmem:[#allocation5 + $0x10] sm:$0xff]
        %v468 = vld [vmem:[#allocation5 + $0x18] sm:$0xff]
        %v469 = vld [vmem:[#allocation5 + $0x20] sm:$0xff]
        %v470 = vld [vmem:[#allocation5 + $0x28] sm:$0xff]
        %v471 = vld [vmem:[#allocation5 + $0x30] sm:$0xff]
        %v472 = vld [vmem:[#allocation5 + $0x38] sm:$0xff]
        %v473 = vld [vmem:[%s3] sm:$0xff]
        %v474 = vld [vmem:[%s3 + $0x8] sm:$0xff]
        %v475 = vld [vmem:[%s3 + $0x10] sm:$0xff]
        %v476 = vld [vmem:[%s3 + $0x18] sm:$0xff]
        %v477 = vld [vmem:[%s3 + $0x20] sm:$0xff]
        %v478 = vld [vmem:[%s3 + $0x28] sm:$0xff]
        %v479 = vld [vmem:[%s3 + $0x30] sm:$0xff]
        %v480 = vld [vmem:[%s3 + $0x38] sm:$0xff]
        %vm481 = vcmask 195584
        %v483 = vsel %vm481, %v473, 0
        %v486 = vsel %vm481, %v474, 0
        %v489 = vsel %vm481, %v475, 0
        %v492 = vsel %vm481, %v476, 0
        %v495 = vsel %vm481, %v477, 0
        %v498 = vsel %vm481, %v478, 0
        %v501 = vsel %vm481, %v479, 0
        %v504 = vsel %vm481, %v480, 0
        %506 = vmatprep.subr.mxu0 0.0
        %507 = vmatpush1.msra.mxu0 0.0
        %508 = vmatprep.subr.mxu0 0.0
        %509 = vmatpush1.msra.mxu0 0.0
        %510 = vmatprep.subr.mxu0 0.0
        %511 = vmatpush1.msra.mxu0 0.0
        %512 = vmatprep.subr.mxu0 0.0
        %513 = vmatpush1.msra.mxu0 0.0
        %514 = vmatprep.subr.mxu0 0.0
        %515 = vmatpush1.msra.mxu0 0.0
        %516 = vmatprep.subr.mxu0 0.0
        %517 = vmatpush1.msra.mxu0 0.0
        %518 = vmatprep.subr.mxu0 0.0
        %519 = vmatpush1.msra.mxu0 0.0
        %520 = vmatprep.subr.mxu0 0.0
        %521 = vmatpush1.msra.mxu0 0.0
        %522 = vmatprep.subr.mxu0 0.0
        %523 = vmatpush1.msra.mxu0 0.0
        %524 = vmatprep.subr.mxu0 0.0
        %525 = vmatpush1.msra.mxu0 0.0
        %526 = vmatprep.subr.mxu0 0.0
        %527 = vmatpush1.msra.mxu0 0.0
        %528 = vmatprep.subr.mxu0 0.0
        %529 = vmatpush1.msra.mxu0 0.0
        %530 = vmatprep.subr.mxu0 0.0
        %531 = vmatpush1.msra.mxu0 0.0
        %532 = vmatprep.subr.mxu0 %v287
        %533 = vmatpush1.msra.mxu0 %v286
        %534 = vmatprep.subr.mxu0 %v285
        %535 = vmatpush1.msra.mxu0 %v284
        %536 = vmatprep.subr.mxu0 %v283
        %537 = vmatpush1.msra.mxu0 %v282
        %538 = vmatprep.subr.mxu0 0.0
        %539 = vmatpush2.msra.mxu0 0.0
        %540 = vmatprep.subr.mxu0 0.0
        %541 = vmatpush2.msra.mxu0 0.0
        %542 = vmatprep.subr.mxu0 0.0
        %543 = vmatpush2.msra.mxu0 0.0
        %544 = vmatprep.subr.mxu0 0.0
        %545 = vmatpush2.msra.mxu0 0.0
        %546 = vmatprep.subr.mxu0 0.0
        %547 = vmatpush2.msra.mxu0 0.0
        %548 = vmatprep.subr.mxu0 0.0
        %549 = vmatpush2.msra.mxu0 0.0
        %550 = vmatprep.subr.mxu0 0.0
        %551 = vmatpush2.msra.mxu0 0.0
        %552 = vmatprep.subr.mxu0 0.0
        %553 = vmatpush2.msra.mxu0 0.0
        %554 = vmatprep.subr.mxu0 0.0
        %555 = vmatpush2.msra.mxu0 0.0
        %556 = vmatprep.subr.mxu0 0.0
        %557 = vmatpush2.msra.mxu0 0.0
        %558 = vmatprep.subr.mxu0 0.0
        %559 = vmatpush2.msra.mxu0 0.0
        %560 = vmatprep.subr.mxu0 0.0
        %561 = vmatpush2.msra.mxu0 0.0
        %562 = vmatprep.subr.mxu0 0.0
        %563 = vmatpush2.msra.mxu0 0.0
        %564 = vmatprep.subr.mxu0 0.0
        %565 = vmatpush2.msra.mxu0 0.0
        %566 = vmatprep.subr.mxu0 0.0
        %567 = vmatpush2.msra.mxu0 0.0
        %568 = vmatprep.subr.mxu0 0.0
        %569 = vmatpush2.msra.mxu0 0.0
        %570 = vmatprep.mubr.f32.mxu0 0.0
        %571 = vmatmul.mubr.f32.gmra.mxu0 %v483
        %v572 = vpop.f32.mrf.mxu0
        %v573 = vadd.f32 0.0, %v572
        %v574 = vpop.f32.mrf.mxu0
        %v575 = vadd.f32 0.0, %v574
        %576 = vmatprep.mubr.f32.mxu0 0.0
        %577 = vmatmul.mubr.f32.gmra.mxu0 %v486
        %v578 = vpop.f32.mrf.mxu0
        %v579 = vadd.f32 0.0, %v578
        %v580 = vpop.f32.mrf.mxu0
        %v581 = vadd.f32 0.0, %v580
        %582 = vmatprep.mubr.f32.mxu0 0.0
        %583 = vmatmul.mubr.f32.gmra.mxu0 %v489
        %v584 = vpop.f32.mrf.mxu0
        %v585 = vadd.f32 0.0, %v584
        %v586 = vpop.f32.mrf.mxu0
        %v587 = vadd.f32 0.0, %v586
        %588 = vmatprep.mubr.f32.mxu0 0.0
        %589 = vmatmul.mubr.f32.gmra.mxu0 %v492
        %v590 = vpop.f32.mrf.mxu0
        %v591 = vadd.f32 0.0, %v590
        %v592 = vpop.f32.mrf.mxu0
        %v593 = vadd.f32 0.0, %v592
        %594 = vmatprep.mubr.f32.mxu0 0.0
        %595 = vmatmul.mubr.f32.gmra.mxu0 %v495
        %v596 = vpop.f32.mrf.mxu0
        %v597 = vadd.f32 0.0, %v596
        %v598 = vpop.f32.mrf.mxu0
        %v599 = vadd.f32 0.0, %v598
        %600 = vmatprep.mubr.f32.mxu0 0.0
        %601 = vmatmul.mubr.f32.gmra.mxu0 %v498
        %v602 = vpop.f32.mrf.mxu0
        %v603 = vadd.f32 0.0, %v602
        %v604 = vpop.f32.mrf.mxu0
        %v605 = vadd.f32 0.0, %v604
        %606 = vmatprep.mubr.f32.mxu0 0.0
        %607 = vmatmul.mubr.f32.gmra.mxu0 %v501
        %v608 = vpop.f32.mrf.mxu0
        %v609 = vadd.f32 0.0, %v608
        %v610 = vpop.f32.mrf.mxu0
        %v611 = vadd.f32 0.0, %v610
        %612 = vmatprep.mubr.f32.mxu0 0.0
        %613 = vmatmul.mubr.f32.gmra.mxu0 %v504
        %v614 = vpop.f32.mrf.mxu0
        %v615 = vadd.f32 0.0, %v614
        %v616 = vpop.f32.mrf.mxu0
        %v617 = vadd.f32 0.0, %v616
        %618 = vdwg.mxu0
        %vm619 = vcmask 588800
        %v621 = vsel %vm619, %v465, 0
        %v624 = vsel %vm619, %v466, 0
        %v627 = vsel %vm619, %v467, 0
        %v630 = vsel %vm619, %v468, 0
        %v633 = vsel %vm619, %v469, 0
        %v636 = vsel %vm619, %v470, 0
        %v639 = vsel %vm619, %v471, 0
        %v642 = vsel %vm619, %v472, 0
        %644 = vmatprep.subr.mxu0 0.0
        %645 = vmatpush1.msra.mxu0 0.0
        %646 = vmatprep.subr.mxu0 0.0
        %647 = vmatpush1.msra.mxu0 0.0
        %648 = vmatprep.subr.mxu0 0.0
        %649 = vmatpush1.msra.mxu0 0.0
        %650 = vmatprep.subr.mxu0 0.0
        %651 = vmatpush1.msra.mxu0 0.0
        %652 = vmatprep.subr.mxu0 0.0
        %653 = vmatpush1.msra.mxu0 0.0
        %654 = vmatprep.subr.mxu0 0.0
        %655 = vmatpush1.msra.mxu0 0.0
        %656 = vmatprep.subr.mxu0 0.0
        %657 = vmatpush1.msra.mxu0 0.0
        %658 = vmatprep.subr.mxu0 %v464
        %659 = vmatpush1.msra.mxu0 %v463
        %660 = vmatprep.subr.mxu0 %v442
        %661 = vmatpush1.msra.mxu0 %v441
        %662 = vmatprep.subr.mxu0 %v420
        %663 = vmatpush1.msra.mxu0 %v419
        %664 = vmatprep.subr.mxu0 %v398
        %665 = vmatpush1.msra.mxu0 %v397
        %666 = vmatprep.subr.mxu0 %v281
        %667 = vmatpush1.msra.mxu0 %v280
        %668 = vmatprep.subr.mxu0 %v376
        %669 = vmatpush1.msra.mxu0 %v375
        %670 = vmatprep.subr.mxu0 %v354
        %671 = vmatpush1.msra.mxu0 %v353
        %672 = vmatprep.subr.mxu0 %v332
        %673 = vmatpush1.msra.mxu0 %v331
        %674 = vmatprep.subr.mxu0 %v310
        %675 = vmatpush1.msra.mxu0 %v309
        %676 = vmatprep.subr.mxu0 0.0
        %677 = vmatpush2.msra.mxu0 0.0
        %678 = vmatprep.subr.mxu0 0.0
        %679 = vmatpush2.msra.mxu0 0.0
        %680 = vmatprep.subr.mxu0 0.0
        %681 = vmatpush2.msra.mxu0 0.0
        %682 = vmatprep.subr.mxu0 0.0
        %683 = vmatpush2.msra.mxu0 0.0
        %684 = vmatprep.subr.mxu0 0.0
        %685 = vmatpush2.msra.mxu0 0.0
        %686 = vmatprep.subr.mxu0 0.0
        %687 = vmatpush2.msra.mxu0 0.0
        %688 = vmatprep.subr.mxu0 0.0
        %689 = vmatpush2.msra.mxu0 0.0
        %690 = vmatprep.subr.mxu0 0.0
        %691 = vmatpush2.msra.mxu0 0.0
        %692 = vmatprep.subr.mxu0 0.0
        %693 = vmatpush2.msra.mxu0 0.0
        %694 = vmatprep.subr.mxu0 0.0
        %695 = vmatpush2.msra.mxu0 0.0
        %696 = vmatprep.subr.mxu0 0.0
        %697 = vmatpush2.msra.mxu0 0.0
        %698 = vmatprep.subr.mxu0 0.0
        %699 = vmatpush2.msra.mxu0 0.0
        %700 = vmatprep.subr.mxu0 0.0
        %701 = vmatpush2.msra.mxu0 0.0
        %702 = vmatprep.subr.mxu0 0.0
        %703 = vmatpush2.msra.mxu0 0.0
        %704 = vmatprep.subr.mxu0 0.0
        %705 = vmatpush2.msra.mxu0 0.0
        %706 = vmatprep.subr.mxu0 0.0
        %707 = vmatpush2.msra.mxu0 0.0
        %708 = vmatprep.mubr.f32.mxu0 0.0
        %709 = vmatmul.mubr.f32.gmra.mxu0 %v621
        %v710 = vpop.f32.mrf.mxu0
        %v711 = vadd.f32 %v573, %v710
        %v712 = vpop.f32.mrf.mxu0
        %v713 = vadd.f32 %v575, %v712
        %714 = vmatprep.mubr.f32.mxu0 0.0
        %715 = vmatmul.mubr.f32.gmra.mxu0 %v624
        %v716 = vpop.f32.mrf.mxu0
        %v717 = vadd.f32 %v579, %v716
        %v718 = vpop.f32.mrf.mxu0
        %v719 = vadd.f32 %v581, %v718
        %720 = vmatprep.mubr.f32.mxu0 0.0
        %721 = vmatmul.mubr.f32.gmra.mxu0 %v627
        %v722 = vpop.f32.mrf.mxu0
        %v723 = vadd.f32 %v585, %v722
        %v724 = vpop.f32.mrf.mxu0
        %v725 = vadd.f32 %v587, %v724
        %726 = vmatprep.mubr.f32.mxu0 0.0
        %727 = vmatmul.mubr.f32.gmra.mxu0 %v630
        %v728 = vpop.f32.mrf.mxu0
        %v729 = vadd.f32 %v591, %v728
        %v730 = vpop.f32.mrf.mxu0
        %v731 = vadd.f32 %v593, %v730
        %732 = vmatprep.mubr.f32.mxu0 0.0
        %733 = vmatmul.mubr.f32.gmra.mxu0 %v633
        %v734 = vpop.f32.mrf.mxu0
        %v735 = vadd.f32 %v597, %v734
        %v736 = vpop.f32.mrf.mxu0
        %v737 = vadd.f32 %v599, %v736
        %738 = vmatprep.mubr.f32.mxu0 0.0
        %739 = vmatmul.mubr.f32.gmra.mxu0 %v636
        %v740 = vpop.f32.mrf.mxu0
        %v741 = vadd.f32 %v603, %v740
        %v742 = vpop.f32.mrf.mxu0
        %v743 = vadd.f32 %v605, %v742
        %744 = vmatprep.mubr.f32.mxu0 0.0
        %745 = vmatmul.mubr.f32.gmra.mxu0 %v639
        %v746 = vpop.f32.mrf.mxu0
        %v747 = vadd.f32 %v609, %v746
        %v748 = vpop.f32.mrf.mxu0
        %v749 = vadd.f32 %v611, %v748
        %750 = vmatprep.mubr.f32.mxu0 0.0
        %751 = vmatmul.mubr.f32.gmra.mxu0 %v642
        %v752 = vpop.f32.mrf.mxu0
        %v753 = vadd.f32 %v615, %v752
        %v754 = vpop.f32.mrf.mxu0
        %v755 = vadd.f32 %v617, %v754
        %756 = vdwg.mxu0
        %v757 = vld [vmem:[%s4] sm:$0xff]
        %v758 = vld [vmem:[%s4 + $0x8] sm:$0xff]
        %v759 = vld [vmem:[%s4 + $0x10] sm:$0xff]
        %v760 = vld [vmem:[%s4 + $0x18] sm:$0xff]
        %v761 = vld [vmem:[%s4 + $0x20] sm:$0xff]
        %v762 = vld [vmem:[%s4 + $0x28] sm:$0xff]
        %v763 = vld [vmem:[%s4 + $0x30] sm:$0xff]
        %v764 = vld [vmem:[%s4 + $0x38] sm:$0xff]
        %766 = vset.pattern.permute.xlu0 0
        %767 = vperm.xlu0 %766, %v757
        %v768 = vpop.permute.xlu0 %767
        %771 = vset.pattern.permute.xlu0 0
        %772 = vperm.xlu0 %771, %v758
        %v773 = vpop.permute.xlu0 %772
        %776 = vset.pattern.permute.xlu0 0
        %777 = vperm.xlu0 %776, %v759
        %v778 = vpop.permute.xlu0 %777
        %781 = vset.pattern.permute.xlu0 0
        %782 = vperm.xlu0 %781, %v760
        %v783 = vpop.permute.xlu0 %782
        %786 = vset.pattern.permute.xlu0 0
        %787 = vperm.xlu0 %786, %v761
        %v788 = vpop.permute.xlu0 %787
        %791 = vset.pattern.permute.xlu0 0
        %792 = vperm.xlu0 %791, %v762
        %v793 = vpop.permute.xlu0 %792
        %796 = vset.pattern.permute.xlu0 0
        %797 = vperm.xlu0 %796, %v763
        %v798 = vpop.permute.xlu0 %797
        %801 = vset.pattern.permute.xlu0 0
        %802 = vperm.xlu0 %801, %v764
        %v803 = vpop.permute.xlu0 %802
        %v805 = vadd.f32 %v711, %v768
        %v806 = vadd.f32 %v713, %v768
        %v807 = vadd.f32 %v717, %v773
        %v808 = vadd.f32 %v719, %v773
        %v809 = vadd.f32 %v723, %v778
        %v810 = vadd.f32 %v725, %v778
        %v811 = vadd.f32 %v729, %v783
        %v812 = vadd.f32 %v731, %v783
        %v813 = vadd.f32 %v735, %v788
        %v814 = vadd.f32 %v737, %v788
        %v815 = vadd.f32 %v741, %v793
        %v816 = vadd.f32 %v743, %v793
        %v817 = vadd.f32 %v747, %v798
        %v818 = vadd.f32 %v749, %v798
        %v819 = vadd.f32 %v753, %v803
        %v820 = vadd.f32 %v755, %v803
        %v821 = vmax.f32 %v805, 0.0
        %v822 = vmax.f32 %v806, 0.0
        %v823 = vmax.f32 %v807, 0.0
        %v824 = vmax.f32 %v808, 0.0
        %v825 = vmax.f32 %v809, 0.0
        %v826 = vmax.f32 %v810, 0.0
        %v827 = vmax.f32 %v811, 0.0
        %v828 = vmax.f32 %v812, 0.0
        %v829 = vmax.f32 %v813, 0.0
        %v830 = vmax.f32 %v814, 0.0
        %v831 = vmax.f32 %v815, 0.0
        %v832 = vmax.f32 %v816, 0.0
        %v833 = vmax.f32 %v817, 0.0
        %v834 = vmax.f32 %v818, 0.0
        %v835 = vmax.f32 %v819, 0.0
        %v836 = vmax.f32 %v820, 0.0
        %v837 = vld [vmem:[%s5] sm:$0xff]
        %v838 = vld [vmem:[%s5 + $0x8] sm:$0xff]
        %v839 = vld [vmem:[%s5 + $0x10] sm:$0xff]
        %v840 = vld [vmem:[%s5 + $0x18] sm:$0xff]
        %vm841 = vcmask 523264
        %v843 = vsel %vm841, %v837, 0
        %v846 = vsel %vm841, %v838, 0
        %v849 = vsel %vm841, %v839, 0
        %v852 = vsel %vm841, %v840, 0
        %854 = vmatprep.subr.mxu0 0.0
        %855 = vmatpush1.msra.mxu0 0.0
        %856 = vmatprep.subr.mxu0 0.0
        %857 = vmatpush1.msra.mxu0 0.0
        %858 = vmatprep.subr.mxu0 0.0
        %859 = vmatpush1.msra.mxu0 0.0
        %860 = vmatprep.subr.mxu0 0.0
        %861 = vmatpush1.msra.mxu0 0.0
        %862 = vmatprep.subr.mxu0 0.0
        %863 = vmatpush1.msra.mxu0 0.0
        %864 = vmatprep.subr.mxu0 0.0
        %865 = vmatpush1.msra.mxu0 0.0
        %866 = vmatprep.subr.mxu0 0.0
        %867 = vmatpush1.msra.mxu0 0.0
        %868 = vmatprep.subr.mxu0 0.0
        %869 = vmatpush1.msra.mxu0 0.0
        %870 = vmatprep.subr.mxu0 %v836
        %871 = vmatpush1.msra.mxu0 %v835
        %872 = vmatprep.subr.mxu0 %v834
        %873 = vmatpush1.msra.mxu0 %v833
        %874 = vmatprep.subr.mxu0 %v832
        %875 = vmatpush1.msra.mxu0 %v831
        %876 = vmatprep.subr.mxu0 %v830
        %877 = vmatpush1.msra.mxu0 %v829
        %878 = vmatprep.subr.mxu0 %v828
        %879 = vmatpush1.msra.mxu0 %v827
        %880 = vmatprep.subr.mxu0 %v826
        %881 = vmatpush1.msra.mxu0 %v825
        %882 = vmatprep.subr.mxu0 %v824
        %883 = vmatpush1.msra.mxu0 %v823
        %884 = vmatprep.subr.mxu0 %v822
        %885 = vmatpush1.msra.mxu0 %v821
        %886 = vmatprep.subr.mxu0 0.0
        %887 = vmatpush2.msra.mxu0 0.0
        %888 = vmatprep.subr.mxu0 0.0
        %889 = vmatpush2.msra.mxu0 0.0
        %890 = vmatprep.subr.mxu0 0.0
        %891 = vmatpush2.msra.mxu0 0.0
        %892 = vmatprep.subr.mxu0 0.0
        %893 = vmatpush2.msra.mxu0 0.0
        %894 = vmatprep.subr.mxu0 0.0
        %895 = vmatpush2.msra.mxu0 0.0
        %896 = vmatprep.subr.mxu0 0.0
        %897 = vmatpush2.msra.mxu0 0.0
        %898 = vmatprep.subr.mxu0 0.0
        %899 = vmatpush2.msra.mxu0 0.0
        %900 = vmatprep.subr.mxu0 0.0
        %901 = vmatpush2.msra.mxu0 0.0
        %902 = vmatprep.subr.mxu0 0.0
        %903 = vmatpush2.msra.mxu0 0.0
        %904 = vmatprep.subr.mxu0 0.0
        %905 = vmatpush2.msra.mxu0 0.0
        %906 = vmatprep.subr.mxu0 0.0
        %907 = vmatpush2.msra.mxu0 0.0
        %908 = vmatprep.subr.mxu0 0.0
        %909 = vmatpush2.msra.mxu0 0.0
        %910 = vmatprep.subr.mxu0 0.0
        %911 = vmatpush2.msra.mxu0 0.0
        %912 = vmatprep.subr.mxu0 0.0
        %913 = vmatpush2.msra.mxu0 0.0
        %914 = vmatprep.subr.mxu0 0.0
        %915 = vmatpush2.msra.mxu0 0.0
        %916 = vmatprep.subr.mxu0 0.0
        %917 = vmatpush2.msra.mxu0 0.0
        %918 = vmatprep.mubr.f32.mxu0 0.0
        %919 = vmatmul.mubr.f32.gmra.mxu0 %v843
        %v920 = vpop.f32.mrf.mxu0
        %v921 = vadd.f32 0.0, %v920
        %v922 = vpop.f32.mrf.mxu0
        %v923 = vadd.f32 0.0, %v922
        %924 = vmatprep.mubr.f32.mxu0 0.0
        %925 = vmatmul.mubr.f32.gmra.mxu0 %v846
        %v926 = vpop.f32.mrf.mxu0
        %v927 = vadd.f32 0.0, %v926
        %v928 = vpop.f32.mrf.mxu0
        %v929 = vadd.f32 0.0, %v928
        %930 = vmatprep.mubr.f32.mxu0 0.0
        %931 = vmatmul.mubr.f32.gmra.mxu0 %v849
        %v932 = vpop.f32.mrf.mxu0
        %v933 = vadd.f32 0.0, %v932
        %v934 = vpop.f32.mrf.mxu0
        %v935 = vadd.f32 0.0, %v934
        %936 = vmatprep.mubr.f32.mxu0 0.0
        %937 = vmatmul.mubr.f32.gmra.mxu0 %v852
        %v938 = vpop.f32.mrf.mxu0
        %v939 = vadd.f32 0.0, %v938
        %v940 = vpop.f32.mrf.mxu0
        %v941 = vadd.f32 0.0, %v940
        %942 = vdwg.mxu0
        %v943 = vadd.f32 %v280, %v921
        %v944 = vadd.f32 %v281, %v923
        %v945 = vadd.f32 %v282, %v927
        %v946 = vadd.f32 %v283, %v929
        %v947 = vadd.f32 %v284, %v933
        %v948 = vadd.f32 %v285, %v935
        %v949 = vadd.f32 %v286, %v939
        %v950 = vadd.f32 %v287, %v941
        %951 = vst [vmem:[%s274] sm:$0xff] %v943
        %952 = vst [vmem:[%s274 + $0x8] sm:$0xff] %v944
        %953 = vst [vmem:[%s274 + $0x10] sm:$0xff] %v945
        %954 = vst [vmem:[%s274 + $0x18] sm:$0xff] %v946
        %955 = vst [vmem:[%s274 + $0x20] sm:$0xff] %v947
        %956 = vst [vmem:[%s274 + $0x28] sm:$0xff] %v948
        %957 = vst [vmem:[%s274 + $0x30] sm:$0xff] %v949
        %958 = vst [vmem:[%s274 + $0x38] sm:$0xff] %v950
        %s959 = sand.u32 %s161, 1
        %s960 = scalar_lea.sflag [#allocation4], %s959
        %s961 = sand.u32 %s161, 1
        %s962 = smul.addr %s961, 64
        %s963 = scalar_lea.vmem [#allocation7], %s962
        // Predicated region
        $region53: #{tpu_custom_call.1} parent=43 // pred_check
          %p964 = pneg %p171
        $region54: #{tpu_custom_call.1} parent=43 // pred_check_branch
          %966 = sbr.rel (%p964) target = $region56
        $region55: #{tpu_custom_call.1} parent=43 // pred_region
          %s968 = ssub.s32 1024, 1024
          %969 = vsyncadd %s960, %s968
          %s970 = smul.addr %s22, 8
          %s971 = smul.addr %s970, 128
          %s972 = scalar_lea.hbm %s6, %s971
          %s973 = sshll.u32 %s963, 4
          %s974 = int_to_ptr.vmem [resolvable:$true] %s973
          %979 = dma.vmem_to_hbm [thread:$0]  %s974, 1024, %s972, %s960, 256, 256, 16
        $region56: #{tpu_custom_call.1} parent=43 // pred_fallthru
          _
      $region44: #{tpu_custom_call.1} parent=5 // pred_fallthru
        _
      %p980 = scmp.le.s32.totalorder 2, %s17
      // Predicated region
      $region57: #{tpu_custom_call.1} parent=5 // pred_check
        %p981 = pneg %p980
      $region58: #{tpu_custom_call.1} parent=5 // pred_check_branch
        %983 = sbr.rel (%p981) target = $region60
      $region59: #{tpu_custom_call.1} parent=5 // pred_region
        %s984 = ssub.s32 %s17, 2
        // Predicated region
        $region61: #{tpu_custom_call.1} parent=59 // pred_check
          %p985 = pneg %p177
        $region62: #{tpu_custom_call.1} parent=59 // pred_check_branch
          %987 = sbr.rel (%p985) target = $region64
        $region63: #{tpu_custom_call.1} parent=59 // pred_region
          %s988 = sand.u32 %s162, 1
          %s989 = scalar_lea.sflag [#allocation4], %s988
          %s990 = sand.u32 %s162, 1
          %s991 = smul.addr %s990, 64
          %s992 = scalar_lea.vmem [#allocation7], %s991
          %993 = dma.done %s989, 1024
        $region64: #{tpu_custom_call.1} parent=59 // pred_fallthru
          _
      $region60: #{tpu_custom_call.1} parent=5 // pred_fallthru
        _
    $region6: #{tpu_custom_call.1} parent=1 // loop_footer
      %s21 = sadd.s32 1, %s17
    $region7: #{tpu_custom_call.1} parent=1 // loop_footer_branch
      %16 = sbr.rel target = $region3
    $region8: #{tpu_custom_call.1} parent=1 // loop_exit
      _
    %994 = vsyncpa [#allocation3], 1
    %s995 = scalar_lea.sflag [#allocation3], 1
    %996 = vsyncpa %s995, 1
    %997 = vsyncpa [#allocation6], 1
    %998 = vsyncpa [#allocation4], 1
    %s999 = scalar_lea.sflag [#allocation4], 1
    %1000 = vsyncpa %s999, 1

</llo_original>
